<compile_context>
chip_gen: v7x
topology: tpu7x:2x2x1
jax: 0.10.0
libtpu: 0.0.40
codegen_flags: <defaults>
</compile_context>

<pallas_src>
import jax
import jax.numpy as jnp
from jax.experimental import pallas as pl
from jax.experimental.pallas import tpu as pltpu


def _round_up(n, m):
    return ((n + m - 1) // m) * m


def _choose_tb(B, block_b, H):
    """Batch tile: full batch for small B, else a multiple of 256 capped by a
    VMEM-temporaries budget and by ceil(B/2) (>= 2 grid steps for v7x)."""
    if B <= 512:
        return B  # block == full array dim: always legal, single grid step
    # h1/h2 temporaries cost ~10 B/elem (f32 h1 + f32 h2 + bf16 h1 copy);
    # keep them under ~8 MiB so bigger tiles never flip us into spill-land.
    vmem_cap = max(256, ((8 << 20) // (10 * H)) // 256 * 256)
    tb = _round_up(min(block_b, pl.cdiv(B, 2)), 256)  # >= 2 steps (megacore)
    return max(256, min(tb, vmem_cap))


def _vmem_limit_bytes(TB, IN, H, w1_itemsize):
    """Scoped-VMEM request sized from the real buffers (v5e default is 16 MiB)."""
    x_io = 2 * TB * IN * 4                      # double-buffered f32 x tile
    out_io = 2 * TB * 4                         # double-buffered f32 out row
    wts = 2 * (IN * H * w1_itemsize + H * H * 2 + 3 * H * 4 + 32)
    tmps = TB * H * (4 + 4 + 2) + TB * IN * 4   # h1/h2 f32 + h1 bf16 + x copy
    est = x_io + out_io + wts + tmps
    return int(min(64 << 20, max(32 << 20, 2 * est)))


def _make_kernel(l1_on_vpu):
    def mlp_kernel(x_ref, w1_ref, b1_ref, w2_ref, b2_ref, w3_ref, b3_ref, o_ref):
        # ---- Layer 1: Linear(in, H) ----
        if l1_on_vpu:
            # IN is tiny: unrolled broadcast-FMAs on the VPU in f32 (skips a
            # nearly-empty MXU pass, keeps x at full precision).
            xf = x_ref[...]                                     # (TB, IN) f32
            h1 = xf[:, 0:1] * w1_ref[0:1, :]
            for i in range(1, xf.shape[-1]):                    # static unroll
                h1 = h1 + xf[:, i:i + 1] * w1_ref[i:i + 1, :]
        else:
            # bf16 cast done in-kernel (hidden under the DMA pipeline); x
            # streams from HBM in f32.
            h1 = jnp.dot(x_ref[...].astype(jnp.bfloat16), w1_ref[...],
                         preferred_element_type=jnp.float32)
        h1 = jnp.maximum(h1 + b1_ref[...], 0.0)
        # TODO(synk): Dropout is identity at inference; training-mode dropout
        # (pltpu.prng_random_bits mask) not implemented here.

        # ---- Layer 2: Linear(H, H) + ReLU (bf16 MXU, f32 accumulate) ----
        h2 = jnp.dot(h1.astype(jnp.bfloat16), w2_ref[...],
                     preferred_element_type=jnp.float32)
        h2 = jnp.maximum(h2 + b2_ref[...], 0.0)

        # ---- Layer 3: Linear(H, 1) on VPU (mul) + XLU (lane reduce); store
        # lane-dense as a (1, TB) row instead of a width-1 column. ----
        out_row = jnp.sum(h2 * w3_ref[...], axis=-1) + b3_ref[0]   # (TB,)
        o_ref[...] = out_row.reshape(o_ref.shape).astype(o_ref.dtype)

    return mlp_kernel


def mse_model_forward(x, params, block_b=2048):
    """x: (B, in_shape) float32. Returns torch.squeeze-equivalent prediction."""
    w1, b1, w2, b2, w3, b3 = params
    B, IN = x.shape
    H = w1.shape[1]
    l1_on_vpu = IN <= 16

    TB = _choose_tb(B, block_b, H)
    G = pl.cdiv(B, TB)

    # Weights: bf16 where they feed the MXU, f32 where used on the VPU.
    # These are resident (constant index_map) so the cast cost is one-time.
    w1_k = w1.astype(jnp.float32 if l1_on_vpu else jnp.bfloat16)
    w2_bf = w2.astype(jnp.bfloat16)
    w3_row = w3.reshape(1, H).astype(jnp.float32)   # (1, H) row for VPU layer 3
    b1_k = b1.reshape(1, H).astype(jnp.float32)
    b2_k = b2.reshape(1, H).astype(jnp.float32)
    b3_s = b3.reshape(1).astype(jnp.float32)        # scalar bias -> SMEM

    resident = lambda shape: pl.BlockSpec(shape, lambda i: (0, 0))

    out = pl.pallas_call(
        _make_kernel(l1_on_vpu),
        out_shape=jax.ShapeDtypeStruct((G, TB), jnp.float32),
        grid_spec=pltpu.PrefetchScalarGridSpec(
            num_scalar_prefetch=0,
            grid=(G,),
            in_specs=[
                pl.BlockSpec((TB, IN), lambda i: (i, 0)),           # streamed x (f32)
                resident(w1_k.shape),                               # (IN, H)
                resident(b1_k.shape),                               # (1, H)
                resident(w2_bf.shape),                              # (H, H)
                resident(b2_k.shape),                               # (1, H)
                resident(w3_row.shape),                             # (1, H)
                pl.BlockSpec(memory_space=pltpu.MemorySpace.SMEM),  # b3 scalar
            ],
            out_specs=pl.BlockSpec((1, TB), lambda i: (i, 0)),      # lane-dense row
        ),
        compiler_params=pltpu.CompilerParams(
            # Batch tiles are independent -> shard across TensorCores (v7x).
            dimension_semantics=("parallel",),
            vmem_limit_bytes=_vmem_limit_bytes(TB, IN, H, w1_k.dtype.itemsize),
        ),
    )(x, w1_k, b1_k, w2_bf, b2_k, w3_row, b3_s)

    # Drop tail garbage (ragged last block); torch.squeeze on (B, 1) -> (B,)
    # (scalar if B == 1).
    return jnp.squeeze(out.reshape(-1)[:B])


def orthogonal_init(key, out_dim, in_dim):
    """Deterministic orthogonal init (like nn.init.orthogonal_), returned
    already transposed to (in_dim, out_dim) for x @ W layout."""
    rows, cols = out_dim, in_dim
    flat = jax.random.normal(key, (max(rows, cols), min(rows, cols)), jnp.float32)
    q, r = jnp.linalg.qr(flat)
    q = q * jnp.sign(jnp.diagonal(r))[None, :]
    if rows < cols:
        q = q.T
    w = q[:rows, :cols]          # (out_dim, in_dim)
    return w.T                   # (in_dim, out_dim)


def init_params(key, in_shape, hidden_size):
    k1, k2, k3 = jax.random.split(key, 3)
    w1 = orthogonal_init(k1, hidden_size, in_shape)        # (in, H)
    b1 = jnp.zeros((1, hidden_size), jnp.float32)
    w2 = orthogonal_init(k2, hidden_size, hidden_size)     # (H, H)
    b2 = jnp.zeros((1, hidden_size), jnp.float32)
    w3 = orthogonal_init(k3, 1, hidden_size)                # (H, 1)
    b3 = jnp.zeros((1, 1), jnp.float32)
    return (w1, b1, w2, b2, w3, b3)


if __name__ == "__main__":
    key = jax.random.PRNGKey(0)
    k_x, k_p, k_x2 = jax.random.split(key, 3)

    B, IN_SHAPE, HIDDEN = 8, 4, 32
    x = jax.random.normal(k_x, (B, IN_SHAPE), jnp.float32)
    params = init_params(k_p, IN_SHAPE, HIDDEN)
    w1, b1, w2, b2, w3, b3 = params

    def references(xx):
        dotH = lambda a, c: jnp.dot(a, c, precision=jax.lax.Precision.HIGHEST)
        h1 = jnp.maximum(dotH(xx, w1) + b1, 0.0)
        # Pure-f32 reference (module semantics) — loose tolerance.
        hf = jnp.maximum(dotH(h1, w2) + b2, 0.0)
        ref_f32 = jnp.squeeze(dotH(hf, w3) + b3)
        # Mixed-precision reference mimicking the kernel (layer 2 bf16 on MXU,
        # layers 1 & 3 in f32) — tighter tolerance.
        hm = jnp.maximum(
            jnp.dot(h1.astype(jnp.bfloat16), w2.astype(jnp.bfloat16),
                    preferred_element_type=jnp.float32) + b2, 0.0)
        ref_mix = jnp.squeeze(dotH(hm, w3) + b3)
        return ref_f32, ref_mix

    # -- small single-block case --
    y = jax.block_until_ready(mse_model_forward(x, params))
    ref_f32, ref_mix = references(x)
    assert y.shape == (B,)
    assert jnp.allclose(y, ref_mix, atol=1e-2, rtol=1e-2)
    assert jnp.allclose(y, ref_f32, atol=5e-2, rtol=5e-2)

    # -- larger case exercising the tiled grid (>= 2 parallel steps) --
    B2 = 1024
    x2 = jax.random.normal(k_x2, (B2, IN_SHAPE), jnp.float32)
    y2 = jax.block_until_ready(mse_model_forward(x2, params))
    ref2_f32, ref2_mix = references(x2)
    assert y2.shape == (B2,)
    assert jnp.allclose(y2, ref2_mix, atol=1e-2, rtol=1e-2)
    assert jnp.allclose(y2, ref2_f32, atol=5e-2, rtol=5e-2)

    print("KERNEL_OK")
</pallas_src>

<mosaic_0001>
module attributes {stable_mosaic.version = 11 : i64} {
  func.func @mlp_kernel(%arg0: i32, %arg1: memref<8x4xf32, #tpu.memory_space<vmem>>, %arg2: memref<4x32xf32, #tpu.memory_space<vmem>>, %arg3: memref<1x32xf32, #tpu.memory_space<vmem>>, %arg4: memref<32x32xbf16, #tpu.memory_space<vmem>>, %arg5: memref<1x32xf32, #tpu.memory_space<vmem>>, %arg6: memref<1x32xf32, #tpu.memory_space<vmem>>, %arg7: memref<1xf32, #tpu.memory_space<smem>>, %arg8: memref<1x8xf32, #tpu.memory_space<vmem>>) attributes {dimension_semantics = [#tpu.dimension_semantics<parallel>], iteration_bounds = array<i64: 1>, scalar_prefetch = 0 : i64, scratch_operands = 0 : i64, tpu.core_type = #tpu.core_type<tc>, window_params = [{transform_indices = @transform_0, window_bounds = array<i64: 8, 4>}, {pipeline_mode = #tpu.pipeline_mode<synchronous>, transform_indices = @transform_1, window_bounds = array<i64: 4, 32>}, {pipeline_mode = #tpu.pipeline_mode<synchronous>, transform_indices = @transform_2, window_bounds = array<i64: 1, 32>}, {pipeline_mode = #tpu.pipeline_mode<synchronous>, transform_indices = @transform_3, window_bounds = array<i64: 32, 32>}, {pipeline_mode = #tpu.pipeline_mode<synchronous>, transform_indices = @transform_4, window_bounds = array<i64: 1, 32>}, {pipeline_mode = #tpu.pipeline_mode<synchronous>, transform_indices = @transform_5, window_bounds = array<i64: 1, 32>}, {transform_indices = @transform_6, window_bounds = array<i64: 1>}, {transform_indices = @transform_7, window_bounds = array<i64: 1, 8>}]} {
    %c0 = arith.constant 0 : index
    %c0_0 = arith.constant 0 : index
    %0 = vector.load %arg1[%c0, %c0_0] : memref<8x4xf32, #tpu.memory_space<vmem>>, vector<8x4xf32>
    %1 = vector.extract_strided_slice %0 {offsets = [0, 0], sizes = [8, 1], strides = [1, 1]} : vector<8x4xf32> to vector<8x1xf32>
    %c0_1 = arith.constant 0 : index
    %c0_2 = arith.constant 0 : index
    %2 = vector.load %arg2[%c0_1, %c0_2] : memref<4x32xf32, #tpu.memory_space<vmem>>, vector<1x32xf32>
    %3 = vector.broadcast %1 : vector<8x1xf32> to vector<8x32xf32>
    %4 = vector.broadcast %2 : vector<1x32xf32> to vector<8x32xf32>
    %5 = arith.mulf %3, %4 : vector<8x32xf32>
    %6 = vector.extract_strided_slice %0 {offsets = [0, 1], sizes = [8, 1], strides = [1, 1]} : vector<8x4xf32> to vector<8x1xf32>
    %c1 = arith.constant 1 : index
    %c0_3 = arith.constant 0 : index
    %7 = vector.load %arg2[%c1, %c0_3] : memref<4x32xf32, #tpu.memory_space<vmem>>, vector<1x32xf32>
    %8 = vector.broadcast %6 : vector<8x1xf32> to vector<8x32xf32>
    %9 = vector.broadcast %7 : vector<1x32xf32> to vector<8x32xf32>
    %10 = arith.mulf %8, %9 : vector<8x32xf32>
    %11 = arith.addf %5, %10 : vector<8x32xf32>
    %12 = vector.extract_strided_slice %0 {offsets = [0, 2], sizes = [8, 1], strides = [1, 1]} : vector<8x4xf32> to vector<8x1xf32>
    %c2 = arith.constant 2 : index
    %c0_4 = arith.constant 0 : index
    %13 = vector.load %arg2[%c2, %c0_4] : memref<4x32xf32, #tpu.memory_space<vmem>>, vector<1x32xf32>
    %14 = vector.broadcast %12 : vector<8x1xf32> to vector<8x32xf32>
    %15 = vector.broadcast %13 : vector<1x32xf32> to vector<8x32xf32>
    %16 = arith.mulf %14, %15 : vector<8x32xf32>
    %17 = arith.addf %11, %16 : vector<8x32xf32>
    %18 = vector.extract_strided_slice %0 {offsets = [0, 3], sizes = [8, 1], strides = [1, 1]} : vector<8x4xf32> to vector<8x1xf32>
    %c3 = arith.constant 3 : index
    %c0_5 = arith.constant 0 : index
    %19 = vector.load %arg2[%c3, %c0_5] : memref<4x32xf32, #tpu.memory_space<vmem>>, vector<1x32xf32>
    %20 = vector.broadcast %18 : vector<8x1xf32> to vector<8x32xf32>
    %21 = vector.broadcast %19 : vector<1x32xf32> to vector<8x32xf32>
    %22 = arith.mulf %20, %21 : vector<8x32xf32>
    %23 = arith.addf %17, %22 : vector<8x32xf32>
    %c0_6 = arith.constant 0 : index
    %c0_7 = arith.constant 0 : index
    %24 = vector.load %arg3[%c0_6, %c0_7] : memref<1x32xf32, #tpu.memory_space<vmem>>, vector<1x32xf32>
    %25 = vector.broadcast %24 : vector<1x32xf32> to vector<8x32xf32>
    %26 = arith.addf %23, %25 : vector<8x32xf32>
    %cst = arith.constant 0.000000e+00 : f32
    %27 = vector.broadcast %cst : f32 to vector<8x32xf32>
    %28 = arith.maximumf %26, %27 : vector<8x32xf32>
    %29 = arith.truncf %28 : vector<8x32xf32> to vector<8x32xbf16>
    %c0_8 = arith.constant 0 : index
    %c0_9 = arith.constant 0 : index
    %30 = vector.load %arg4[%c0_8, %c0_9] : memref<32x32xbf16, #tpu.memory_space<vmem>>, vector<32x32xbf16>
    %cst_10 = arith.constant dense<0.000000e+00> : vector<8x32xf32>
    %31 = tpu.matmul %29, %30, %cst_10 {dimension_numbers = #tpu.dot_dimension_numbers<[1], [0], [0], [1], [0, 0, 1, 1], [], []>} : vector<8x32xbf16>, vector<32x32xbf16>, vector<8x32xf32> -> vector<8x32xf32>
    %c0_11 = arith.constant 0 : index
    %c0_12 = arith.constant 0 : index
    %32 = vector.load %arg5[%c0_11, %c0_12] : memref<1x32xf32, #tpu.memory_space<vmem>>, vector<1x32xf32>
    %33 = vector.broadcast %32 : vector<1x32xf32> to vector<8x32xf32>
    %34 = arith.addf %31, %33 : vector<8x32xf32>
    %cst_13 = arith.constant 0.000000e+00 : f32
    %35 = vector.broadcast %cst_13 : f32 to vector<8x32xf32>
    %36 = arith.maximumf %34, %35 : vector<8x32xf32>
    %c0_14 = arith.constant 0 : index
    %c0_15 = arith.constant 0 : index
    %37 = vector.load %arg6[%c0_14, %c0_15] : memref<1x32xf32, #tpu.memory_space<vmem>>, vector<1x32xf32>
    %38 = vector.broadcast %37 : vector<1x32xf32> to vector<8x32xf32>
    %39 = arith.mulf %36, %38 : vector<8x32xf32>
    %cst_16 = arith.constant dense<0.000000e+00> : vector<8xf32>
    %40 = vector.multi_reduction <add>, %39, %cst_16 [1] : vector<8x32xf32> to vector<8xf32>
    %c0_17 = arith.constant 0 : index
    %41 = memref.load %arg7[%c0_17] : memref<1xf32, #tpu.memory_space<smem>>
    %42 = vector.broadcast %41 : f32 to vector<8xf32>
    %43 = arith.addf %40, %42 : vector<8xf32>
    %44 = vector.shape_cast %43 : vector<8xf32> to vector<1x8xf32>
    %c0_18 = arith.constant 0 : index
    %c0_19 = arith.constant 0 : index
    %45 = vector.load %arg8[%c0_18, %c0_19] : memref<1x8xf32, #tpu.memory_space<vmem>>, vector<1x8xf32>
    tpu.vector_store %arg8[%c0_18, %c0_19], %44 {strides = array<i32>} : memref<1x8xf32, #tpu.memory_space<vmem>>, vector<1x8xf32>,
    return
  }
  func.func @transform_0(%arg0: i32) -> (i32, i32) {
    %c0_i32 = arith.constant 0 : i32
    %c0_i32_0 = arith.constant 0 : i32
    return %arg0, %c0_i32 : i32, i32
  }
  func.func @transform_1(%arg0: i32) -> (i32, i32) {
    %c0_i32 = arith.constant 0 : i32
    %c0_i32_0 = arith.constant 0 : i32
    %c0_i32_1 = arith.constant 0 : i32
    return %c0_i32, %c0_i32_0 : i32, i32
  }
  func.func @transform_2(%arg0: i32) -> (i32, i32) {
    %c0_i32 = arith.constant 0 : i32
    %c0_i32_0 = arith.constant 0 : i32
    %c0_i32_1 = arith.constant 0 : i32
    return %c0_i32, %c0_i32_0 : i32, i32
  }
  func.func @transform_3(%arg0: i32) -> (i32, i32) {
    %c0_i32 = arith.constant 0 : i32
    %c0_i32_0 = arith.constant 0 : i32
    %c0_i32_1 = arith.constant 0 : i32
    return %c0_i32, %c0_i32_0 : i32, i32
  }
  func.func @transform_4(%arg0: i32) -> (i32, i32) {
    %c0_i32 = arith.constant 0 : i32
    %c0_i32_0 = arith.constant 0 : i32
    %c0_i32_1 = arith.constant 0 : i32
    return %c0_i32, %c0_i32_0 : i32, i32
  }
  func.func @transform_5(%arg0: i32) -> (i32, i32) {
    %c0_i32 = arith.constant 0 : i32
    %c0_i32_0 = arith.constant 0 : i32
    %c0_i32_1 = arith.constant 0 : i32
    return %c0_i32, %c0_i32_0 : i32, i32
  }
  func.func @transform_6(%arg0: i32) -> i32 {
    %c0_i32 = arith.constant 0 : i32
    %c0_i32_0 = arith.constant 0 : i32
    return %c0_i32 : i32
  }
  func.func @transform_7(%arg0: i32) -> (i32, i32) {
    %c0_i32 = arith.constant 0 : i32
    %c0_i32_0 = arith.constant 0 : i32
    return %arg0, %c0_i32 : i32, i32
  }
}

</mosaic_0001>

<llo_original>
// kernel: tpu_custom_call.1
$region0: #{tpu_custom_call.1}
  #allocation0 [shape = 'u32[]', space=smem, size = 0x4, offset = 0x4, fixed_abs, tag = 'smem constant byte address 0x4 - core index']
  #allocation1 [shape = 'u32[144,128]{1,0:T(1,128)}', space=vmem, size = 0x12000, scoped, tag = 'internal scratch']
  #allocation2 [shape = 'f32[1]{0:T(128)S(6)}', space=smem, size = 0x200, scoped, tag = 'scoped memory for tpu_custom_call.1']
  %s0 = inlined_call_operand.vmem [shape: f32[8,4], index: 0, kind: input, shape index: {}]
  %s1 = inlined_call_operand.vmem [shape: f32[4,32], index: 1, kind: input, shape index: {}]
  %s2 = inlined_call_operand.vmem [shape: f32[1,32], index: 2, kind: input, shape index: {}]
  %s3 = inlined_call_operand.vmem [shape: bf16[32,32], index: 3, kind: input, shape index: {}]
  %s4 = inlined_call_operand.vmem [shape: f32[1,32], index: 4, kind: input, shape index: {}]
  %s5 = inlined_call_operand.vmem [shape: f32[1,32], index: 5, kind: input, shape index: {}]
  %s6 = inlined_call_operand.<no memory space> [shape: f32[1], index: 6, kind: input, shape index: {}]
  %s7 = inlined_call_operand.hbm [shape: f32[1,8], index: 7, kind: output, shape index: {}]
  %s8 = sld [smem:[#allocation0]]
  $region38: #{tpu_custom_call.1} parent=0
    _
  %s10 = ssub.s32 1, %s8
  %s11 = scalar_select 0, %s10, %s8
  %12 = sst [smem:[#allocation2]] %s6
  $region1: #{tpu_custom_call.1} parent=0
    #allocation3 [shape = 'u8[512]{0}', space=vmem, size = 0x400, scoped, tag = 'output window, operand 0, single buffered']
    #allocation4 [shape = 's32[1]{0}', space=sflag, size = 0x4, scoped, tag = 'scoped memory for tpu_custom_call.1']
    %13 = vsyncpa [#allocation4], 0
    // Predicated region
    $region2: #{tpu_custom_call.1} parent=1 // pred_check
      _
    $region3: #{tpu_custom_call.1} parent=1 // pred_check_branch
      %15 = sbr.rel (0) target = $region5
    $region4: #{tpu_custom_call.1} parent=1 // pred_region
      _
    $region5: #{tpu_custom_call.1} parent=1 // pred_fallthru
      _
    // Predicated region
    $region6: #{tpu_custom_call.1} parent=1 // pred_check
      _
    $region7: #{tpu_custom_call.1} parent=1 // pred_check_branch
      %17 = sbr.rel (0) target = $region9
    $region8: #{tpu_custom_call.1} parent=1 // pred_region
      _
    $region9: #{tpu_custom_call.1} parent=1 // pred_fallthru
      _
    // Predicated region
    $region10: #{tpu_custom_call.1} parent=1 // pred_check
      _
    $region11: #{tpu_custom_call.1} parent=1 // pred_check_branch
      %19 = sbr.rel (0) target = $region13
    $region12: #{tpu_custom_call.1} parent=1 // pred_region
      _
    $region13: #{tpu_custom_call.1} parent=1 // pred_fallthru
      _
    // Predicated region
    $region14: #{tpu_custom_call.1} parent=1 // pred_check
      _
    $region15: #{tpu_custom_call.1} parent=1 // pred_check_branch
      %21 = sbr.rel (0) target = $region17
    $region16: #{tpu_custom_call.1} parent=1 // pred_region
      _
    $region17: #{tpu_custom_call.1} parent=1 // pred_fallthru
      _
    // Predicated region
    $region18: #{tpu_custom_call.1} parent=1 // pred_check
      _
    $region19: #{tpu_custom_call.1} parent=1 // pred_check_branch
      %23 = sbr.rel (0) target = $region21
    $region20: #{tpu_custom_call.1} parent=1 // pred_region
      _
    $region21: #{tpu_custom_call.1} parent=1 // pred_fallthru
      _
    // Predicated region
    $region22: #{tpu_custom_call.1} parent=1 // pred_check
      _
    $region23: #{tpu_custom_call.1} parent=1 // pred_check_branch
      %25 = sbr.rel (0) target = $region25
    $region24: #{tpu_custom_call.1} parent=1 // pred_region
      _
    $region25: #{tpu_custom_call.1} parent=1 // pred_fallthru
      _
    // Predicated region
    $region26: #{tpu_custom_call.1} parent=1 // pred_check
      _
    $region27: #{tpu_custom_call.1} parent=1 // pred_check_branch
      %27 = sbr.rel (0) target = $region29
    $region28: #{tpu_custom_call.1} parent=1 // pred_region
      _
    $region29: #{tpu_custom_call.1} parent=1 // pred_fallthru
      _
    %v29 = vld [vmem:[%s0] sm:$0xff]
    %v30 = vld [vmem:[%s1] sm:$0x1]
    %32 = vset.pattern.permute.xlu0 0
    %33 = vperm.xlu0 %32, %v29
    %v34 = vpop.permute.xlu0 %33
    %v36 = vlaneseq
    %v37 = vshrl.u32 %v36, 7
    %v38 = vsub.s32 0, %v37
    %v39 = vrot.slane %v30, %v38
    %v40 = vmul.f32 %v34, %v39
    %v41 = vld [vmem:[%s1 + $0x1] sm:$0x1]
    %42 = vset.pattern.permute.xlu0 1
    %43 = vperm.xlu0 %42, %v29
    %v44 = vpop.permute.xlu0 %43
    %v46 = vlaneseq
    %v47 = vshrl.u32 %v46, 7
    %v48 = vsub.s32 0, %v47
    %v49 = vrot.slane %v41, %v48
    %v50 = vmul.f32 %v44, %v49
    %v51 = vadd.f32 %v40, %v50
    %v52 = vld [vmem:[%s1 + $0x2] sm:$0x1]
    %53 = vset.pattern.permute.xlu0 2
    %54 = vperm.xlu0 %53, %v29
    %v55 = vpop.permute.xlu0 %54
    %v57 = vlaneseq
    %v58 = vshrl.u32 %v57, 7
    %v59 = vsub.s32 0, %v58
    %v60 = vrot.slane %v52, %v59
    %v61 = vmul.f32 %v55, %v60
    %v62 = vadd.f32 %v51, %v61
    %v63 = vld [vmem:[%s1 + $0x3] sm:$0x1]
    %64 = vset.pattern.permute.xlu0 3
    %65 = vperm.xlu0 %64, %v29
    %v66 = vpop.permute.xlu0 %65
    %v68 = vlaneseq
    %v69 = vshrl.u32 %v68, 7
    %v70 = vsub.s32 0, %v69
    %v71 = vrot.slane %v63, %v70
    %v72 = vmul.f32 %v66, %v71
    %v73 = vadd.f32 %v62, %v72
    %v74 = vld [vmem:[%s2] sm:$0x1]
    %v76 = vlaneseq
    %v77 = vshrl.u32 %v76, 7
    %v78 = vsub.s32 0, %v77
    %v79 = vrot.slane %v74, %v78
    %v81 = vadd.f32 %v73, %v79
    %v82 = vmax.f32 %v81, 0.0
    %v83 = vpack.c.bf16 %v82, %v82
    %v84 = vld [vmem:[%s3] sm:$0xf]
    %v85 = vld [vmem:[%s3 + $0x4] sm:$0xf]
    %v86 = vld [vmem:[%s3 + $0x8] sm:$0xf]
    %v87 = vld [vmem:[%s3 + $0xc] sm:$0xf]
    %v88 = vld [vmem:[%s4] sm:$0x1]
    %v90 = vlaneseq
    %v91 = vshrl.u32 %v90, 7
    %v92 = vsub.s32 0, %v91
    %v93 = vrot.slane %v88, %v92
    %v99 = vunpack.c.l.b16 %v84
    %v100 = vunpack.c.l.b16 %v85
    %v101 = vunpack.c.l.b16 %v86
    %v102 = vunpack.c.l.b16 %v87
    %v103 = vpack.c.b16 %v100, %v99
    %v104 = vpack.c.b16 %v102, %v101
    %vm107 = vcmask 261120
    %v109 = vsel %vm107, %v83, 0
    %111 = vmatprep.subr.bf16.mxu0 0
    %112 = vmatpush1.bf16.msra.mxu0 %v103
    %113 = vmatprep.subr.bf16.mxu0 0
    %114 = vmatpush1.bf16.msra.mxu0 %v104
    %115 = vmatprep.subr.bf16.mxu0 0
    %116 = vmatpush1.bf16.msra.mxu0 0
    %117 = vmatprep.subr.bf16.mxu0 0
    %118 = vmatpush1.bf16.msra.mxu0 0
    %119 = vmatprep.subr.bf16.mxu0 0
    %120 = vmatpush1.bf16.msra.mxu0 0
    %121 = vmatprep.subr.bf16.mxu0 0
    %122 = vmatpush1.bf16.msra.mxu0 0
    %123 = vmatprep.subr.bf16.mxu0 0
    %124 = vmatpush1.bf16.msra.mxu0 0
    %125 = vmatprep.subr.bf16.mxu0 0
    %126 = vmatpush1.bf16.msra.mxu0 0
    %127 = vmatprep.subr.bf16.mxu0 0
    %128 = vmatpush1.bf16.msra.mxu0 0
    %129 = vmatprep.subr.bf16.mxu0 0
    %130 = vmatpush1.bf16.msra.mxu0 0
    %131 = vmatprep.subr.bf16.mxu0 0
    %132 = vmatpush1.bf16.msra.mxu0 0
    %133 = vmatprep.subr.bf16.mxu0 0
    %134 = vmatpush1.bf16.msra.mxu0 0
    %135 = vmatprep.subr.bf16.mxu0 0
    %136 = vmatpush1.bf16.msra.mxu0 0
    %137 = vmatprep.subr.bf16.mxu0 0
    %138 = vmatpush1.bf16.msra.mxu0 0
    %139 = vmatprep.subr.bf16.mxu0 0
    %140 = vmatpush1.bf16.msra.mxu0 0
    %141 = vmatprep.subr.bf16.mxu0 0
    %142 = vmatpush1.bf16.msra.mxu0 0
    %143 = vmatprep.mubr.bf16.mxu0 0
    %144 = vmatmul.mubr.bf16.gmra.mrb[0].mxu0 %v109
    %v145 = vpop.f32.mrb[0].mxu0
    %v146 = vadd.f32 %v93, %v145
    %v147 = vpop.f32.mrb[0].mxu0
    %v148 = vpop.f32.mrb[0].mxu0
    %v149 = vpop.f32.mrb[0].mxu0
    %150 = vdwg.mxu0
    %v151 = vmax.f32 %v146, 0.0
    %v152 = vld [vmem:[%s5] sm:$0x1]
    %v154 = vlaneseq
    %v155 = vshrl.u32 %v154, 7
    %v156 = vsub.s32 0, %v155
    %v157 = vrot.slane %v152, %v156
    %v159 = vmul.f32 %v151, %v157
    %v160 = vsel %vm107, %v159, 0.0
    %161 = vadd.xlane.f32.xlu0 %v160
    %v162 = vpop.xlane.xlu0 %161
    %s163 = sld [smem:[#allocation2]]
    %v164 = vstv %s163
    %v165 = vadd.f32 %v162, %v164
    %v167 = vlaneseq
    %v168 = vand.u32 %v167, 127
    %v169 = vlaneseq
    %v170 = vshrl.u32 %v169, 7
    %v171 = vsub.s32 %v168, %v170
    %v172 = vrot.slane %v165, %v171
    %vm174 = vcmask 57344
    %175 = vst.msk [vmem:[#allocation3] sm:$0x1] %vm174, %v172
    // Predicated region
    $region30: #{tpu_custom_call.1} parent=1 // pred_check
      _
    $region31: #{tpu_custom_call.1} parent=1 // pred_check_branch
      %177 = sbr.rel (0) target = $region33
    $region32: #{tpu_custom_call.1} parent=1 // pred_region
      %s179 = ssub.s32 16, 16
      %180 = vsyncadd [#allocation4], %s179
      %s182 = sshll.u32 [#allocation3], 4
      %s183 = int_to_ptr.vmem [resolvable:$true] %s182
      %185 = dma.vmem_to_hbm [thread:$0]  %s183, 16, %s7, [#allocation4]
    $region33: #{tpu_custom_call.1} parent=1 // pred_fallthru
      _
    // Predicated region
    $region34: #{tpu_custom_call.1} parent=1 // pred_check
      _
    $region35: #{tpu_custom_call.1} parent=1 // pred_check_branch
      %187 = sbr.rel (0) target = $region37
    $region36: #{tpu_custom_call.1} parent=1 // pred_region
      %188 = dma.done [#allocation4], 16
    $region37: #{tpu_custom_call.1} parent=1 // pred_fallthru
      _
    %189 = vsyncpa [#allocation4], 1

</llo_original>
